<compile_context>
chip_gen: v6e
topology: v6e:2x2x1
jax: 0.10.0
libtpu: 0.0.40
codegen_flags: <defaults>
</compile_context>

<pallas_src>
import jax
import jax.numpy as jnp
from jax.experimental import pallas as pl
from jax.experimental.pallas import tpu as pltpu

_INV_SQRT2 = 0.7071067811865476


def _erf_approx(z):
    # Abramowitz & Stegun 7.1.26 rational approximation (max abs err ~1.5e-7).
    # TODO(synk): Mosaic has no erf lowering; exact-erf GELU is reproduced via
    # this float32-accurate approximation built from exp/mul/add/recip only.
    a1, a2, a3, a4, a5 = 0.254829592, -0.284496736, 1.421413741, -1.453152027, 1.061405429
    p = 0.3275911
    az = jnp.abs(z)
    d = 1.0 + p * az
    t = pl.reciprocal(d, approx=True)      # EUP slot (free alongside VALU)
    t = t * (2.0 - d * t)                  # one Newton step -> ~f32-accurate 1/d
    poly = ((((a5 * t + a4) * t + a3) * t + a2) * t + a1) * t
    r = 1.0 - poly * jnp.exp(-az * az)
    return jnp.where(z < 0.0, -r, r)


def _gelu_exact(x):
    # PyTorch default nn.GELU() (exact, erf-based).
    return 0.5 * x * (1.0 + _erf_approx(x * _INV_SQRT2))


def _m2ls_kernel(wmix_ref, x_ref, w1_ref, b1_ref, w2_ref, b2s_ref, o_ref):
    """x_ref: (XX, WS, nw_tile, IE); o_ref: (nw_tile, WS*H)."""
    XX, WS, NWT, IE = x_ref.shape
    H = w1_ref.shape[1]
    R = WS * NWT

    w0 = wmix_ref[0, 0]
    w1m = wmix_ref[0, 1]

    # One stacked matmul + one GELU covering both XX slices (rows (xx, ws, nw)).
    # x[..., 0] = 0 is already folded into w1 (row 0 zeroed at prep time).
    x2d = x_ref[...].reshape(XX * R, IE)
    h = jnp.dot(x2d, w1_ref[...], preferred_element_type=jnp.float32) + b1_ref[...]
    g = _gelu_exact(h)
    # TODO(synk): if a bundle dump shows VALU as the binding slot, pack the
    # (rows, H) GELU operand into full 128-lane vregs for ~4x VPU occupancy.

    # Fold the XX mix before proj02 (halves proj02 work); b2 was pre-scaled by
    # (w0 + w1m) at prep time, so this stays exact for any wmix.
    gm = w0 * g[:R, :] + w1m * g[R:, :]               # (R, H), rows (ws, nw)
    y = jnp.dot(gm, w2_ref[...], preferred_element_type=jnp.float32) + b2s_ref[...]

    # Assemble the (nw_tile, WS*H) output slab in registers and store it ONCE,
    # lane-dense: out[nw, ws*H + h] = y[ws*NWT + nw, h].  Static sublane slices
    # + one lane concat replace WS masked 32-lane stores (biggest single lever
    # per the perf review; critical on v5e's single vst slot).
    cols = [y[ws * NWT:(ws + 1) * NWT, :] for ws in range(WS)]
    o_ref[...] = jnp.concatenate(cols, axis=-1).astype(o_ref.dtype)


def _choose_nw_tile(NW, WS, XX, IE, H, B):
    """Pick the NW tile (and NW padding) for one grid step."""
    # Row target: ~16K stacked proj01 rows per step amortizes the ~0.35 us
    # per-step overhead and MXU fill/drain (kernel is memory/overhead bound).
    target = max(8, 16384 // max(1, XX * WS))
    # VMEM budget: double-buffered in/out blocks plus f32 intermediates kept
    # under ~12 MiB so the tile also fits v7x's 64 MiB VMEM with headroom.
    bytes_per_nw = 4 * (2 * XX * WS * IE        # x block (double-buffered)
                        + 2 * WS * H            # out block (double-buffered)
                        + 3 * XX * WS * H)      # h / g / mix intermediates
    target = min(target, max(8, (12 << 20) // max(1, bytes_per_nw)))
    # v7x has 2 TensorCores: keep >= 2 parallel grid steps when B alone can't.
    if B < 2 and NW > 8:
        target = min(target, max(8, (NW // 2) // 8 * 8))
    if NW <= target:
        return NW, 0
    # Largest multiple-of-8 divisor of NW not exceeding the target.
    best = 0
    for d in range(8, target + 1, 8):
        if NW % d == 0:
            best = d
    if best:
        return best, 0
    # No clean divisor: pad NW up to a multiple of an 8-aligned tile so the
    # pipeline stays double-buffered.
    # TODO(synk): a masked tail tile would avoid the pad/slice HBM copy.
    tile = max(8, (target // 8) * 8)
    return tile, (-NW) % tile


def prepare_params(params):
    """One-time prep (hoisted out of the hot path)."""
    w0 = params["wmix"][0, 0]
    w1m = params["wmix"][0, 1]
    return {
        # x[..., 0] = 0 feeding a Linear  <=>  zeroing row 0 of the (in, out)
        # weight (exact because b1 is added after the matmul).
        "w1": params["w1"].at[0, :].set(0.0),
        "b1": params["b1"],
        "w2": params["w2"],
        "b2s": params["b2"] * (w0 + w1m),     # pre-scaled proj02 bias
        "wmix": params["wmix"],
    }


@jax.jit
def mutations_to_latent_space(x, kp):
    """x: (B, 2, WS, NW, IE) float32 -> (B, NW, WS * H) float32."""
    B, XX, WS, NW, IE = x.shape
    assert XX == 2
    H = kp["w1"].shape[1]

    nw_tile, nw_pad = _choose_nw_tile(NW, WS, XX, IE, H, B)
    if nw_pad:
        x = jnp.pad(x, ((0, 0), (0, 0), (0, 0), (0, nw_pad), (0, 0)))
    NWp = NW + nw_pad
    grid = (B, NWp // nw_tile)

    # TODO(synk): at production sizes, shipping x / w1 / w2 as bf16 (f32 accum)
    # cuts HBM traffic ~25%, but deviates from the f32 PyTorch forward, so it
    # is not applied here.
    out = pl.pallas_call(
        _m2ls_kernel,
        out_shape=jax.ShapeDtypeStruct((B, NWp, WS * H), jnp.float32),
        grid=grid,
        in_specs=[
            pl.BlockSpec(memory_space=pltpu.MemorySpace.SMEM),            # wmix (1, 2)
            pl.BlockSpec((None, XX, WS, nw_tile, IE),
                         lambda b, j: (b, 0, 0, j, 0)),                   # x block
            pl.BlockSpec((IE, H), lambda b, j: (0, 0)),                   # w1 (masked)
            pl.BlockSpec((1, H), lambda b, j: (0, 0)),                    # b1
            pl.BlockSpec((H, H), lambda b, j: (0, 0)),                    # w2
            pl.BlockSpec((1, H), lambda b, j: (0, 0)),                    # b2 (pre-scaled)
        ],
        out_specs=pl.BlockSpec((None, nw_tile, WS * H), lambda b, j: (b, j, 0)),
        compiler_params=pltpu.CompilerParams(
            dimension_semantics=("parallel", "parallel"),
            vmem_limit_bytes=32 * 1024 * 1024),
    )(kp["wmix"], x, kp["w1"], kp["b1"], kp["w2"], kp["b2s"])
    if nw_pad:
        out = out[:, :NW, :]
    return out


def reference(x, params):
    """Pure-JAX reference matching the PyTorch forward."""
    x = x.at[..., 0].set(0.0)
    h = jnp.einsum("...i,ij->...j", x, params["w1"]) + params["b1"][0]
    h = jax.nn.gelu(h, approximate=False)
    y = jnp.einsum("...i,ij->...j", h, params["w2"]) + params["b2"][0]
    w = params["wmix"].reshape(1, 2, 1, 1, 1)
    y = (y * w).sum(axis=1)                        # (B, WS, NW, H)
    B, WS, NW, H = y.shape
    return jnp.transpose(y, (0, 2, 1, 3)).reshape(B, NW, WS * H)


def init_params(key, num_samples, sample_scale_embd):
    IE = num_samples
    H = sample_scale_embd * num_samples
    k1, k2, k3, k4 = jax.random.split(key, 4)
    s1 = 1.0 / jnp.sqrt(IE)
    s2 = 1.0 / jnp.sqrt(H)
    return {
        # stored as (in, out), i.e. PyTorch weight.T
        "w1": jax.random.uniform(k1, (IE, H), jnp.float32, -s1, s1),
        "b1": jax.random.uniform(k2, (1, H), jnp.float32, -s1, s1),
        "w2": jax.random.uniform(k3, (H, H), jnp.float32, -s2, s2),
        "b2": jax.random.uniform(k4, (1, H), jnp.float32, -s2, s2),
        "wmix": jnp.array([[0.7, 0.3]], dtype=jnp.float32),  # registered buffer
    }


if __name__ == "__main__":
    # config: num_samples=16, sample_scale_embd=2, dropout=0.0 (inference)
    B, XX, WS, NW, IE = 2, 2, 4, 8, 16
    SSE = 2

    key = jax.random.PRNGKey(0)
    kx, kp = jax.random.split(key)
    x = jax.random.normal(kx, (B, XX, WS, NW, IE), dtype=jnp.float32)
    params = init_params(kp, IE, SSE)
    kparams = prepare_params(params)

    out = jax.block_until_ready(mutations_to_latent_space(x, kparams))
    ref = jax.block_until_ready(reference(x, params))

    assert out.shape == (B, NW, WS * SSE * IE), out.shape
    max_err = float(jnp.max(jnp.abs(out - ref)))
    assert jnp.allclose(out, ref, atol=2e-3, rtol=2e-3), max_err

    print("KERNEL_OK")
</pallas_src>

<mosaic_0001>
module attributes {stable_mosaic.version = 11 : i64} {
  func.func @_m2ls_kernel(%arg0: i32, %arg1: i32, %arg2: memref<1x2xf32, #tpu.memory_space<smem>>, %arg3: memref<1x2x4x8x16xf32, #tpu.memory_space<vmem>>, %arg4: memref<16x32xf32, #tpu.memory_space<vmem>>, %arg5: memref<1x32xf32, #tpu.memory_space<vmem>>, %arg6: memref<32x32xf32, #tpu.memory_space<vmem>>, %arg7: memref<1x32xf32, #tpu.memory_space<vmem>>, %arg8: memref<1x8x128xf32, #tpu.memory_space<vmem>>) attributes {dimension_semantics = [#tpu.dimension_semantics<parallel>, #tpu.dimension_semantics<parallel>], iteration_bounds = array<i64: 2, 1>, scalar_prefetch = 0 : i64, scratch_operands = 0 : i64, tpu.core_type = #tpu.core_type<tc>, window_params = [{transform_indices = @transform_0, window_bounds = array<i64: 1, 2>}, {transform_indices = @transform_1, window_bounds = array<i64: 1, 2, 4, 8, 16>}, {pipeline_mode = #tpu.pipeline_mode<synchronous>, transform_indices = @transform_2, window_bounds = array<i64: 16, 32>}, {pipeline_mode = #tpu.pipeline_mode<synchronous>, transform_indices = @transform_3, window_bounds = array<i64: 1, 32>}, {pipeline_mode = #tpu.pipeline_mode<synchronous>, transform_indices = @transform_4, window_bounds = array<i64: 32, 32>}, {pipeline_mode = #tpu.pipeline_mode<synchronous>, transform_indices = @transform_5, window_bounds = array<i64: 1, 32>}, {transform_indices = @transform_6, window_bounds = array<i64: 1, 8, 128>}]} {
    %c0 = arith.constant 0 : index
    %c0_0 = arith.constant 0 : index
    %0 = memref.load %arg2[%c0, %c0_0] : memref<1x2xf32, #tpu.memory_space<smem>>
    %c0_1 = arith.constant 0 : index
    %c1 = arith.constant 1 : index
    %1 = memref.load %arg2[%c0_1, %c1] : memref<1x2xf32, #tpu.memory_space<smem>>
    %c0_2 = arith.constant 0 : index
    %c0_3 = arith.constant 0 : index
    %c0_4 = arith.constant 0 : index
    %c0_5 = arith.constant 0 : index
    %c0_6 = arith.constant 0 : index
    %2 = vector.load %arg3[%c0_2, %c0_3, %c0_4, %c0_5, %c0_6] : memref<1x2x4x8x16xf32, #tpu.memory_space<vmem>>, vector<1x2x4x8x16xf32>
    %3 = vector.shape_cast %2 : vector<1x2x4x8x16xf32> to vector<2x4x8x16xf32>
    %4 = vector.shape_cast %3 : vector<2x4x8x16xf32> to vector<64x16xf32>
    %c0_7 = arith.constant 0 : index
    %c0_8 = arith.constant 0 : index
    %5 = vector.load %arg4[%c0_7, %c0_8] : memref<16x32xf32, #tpu.memory_space<vmem>>, vector<16x32xf32>
    %cst = arith.constant dense<0.000000e+00> : vector<64x32xf32>
    %6 = tpu.matmul %4, %5, %cst {dimension_numbers = #tpu.dot_dimension_numbers<[1], [0], [0], [1], [0, 0, 1, 1], [], []>} : vector<64x16xf32>, vector<16x32xf32>, vector<64x32xf32> -> vector<64x32xf32>
    %c0_9 = arith.constant 0 : index
    %c0_10 = arith.constant 0 : index
    %7 = vector.load %arg5[%c0_9, %c0_10] : memref<1x32xf32, #tpu.memory_space<vmem>>, vector<1x32xf32>
    %8 = vector.broadcast %7 : vector<1x32xf32> to vector<64x32xf32>
    %9 = arith.addf %6, %8 : vector<64x32xf32>
    %cst_11 = arith.constant 5.000000e-01 : f32
    %10 = vector.broadcast %cst_11 : f32 to vector<64x32xf32>
    %11 = arith.mulf %10, %9 : vector<64x32xf32>
    %cst_12 = arith.constant 0.707106769 : f32
    %12 = vector.broadcast %cst_12 : f32 to vector<64x32xf32>
    %13 = arith.mulf %9, %12 : vector<64x32xf32>
    %14 = math.absf %13 : vector<64x32xf32>
    %cst_13 = arith.constant 0.327591091 : f32
    %15 = vector.broadcast %cst_13 : f32 to vector<64x32xf32>
    %16 = arith.mulf %15, %14 : vector<64x32xf32>
    %cst_14 = arith.constant 1.000000e+00 : f32
    %17 = vector.broadcast %cst_14 : f32 to vector<64x32xf32>
    %18 = arith.addf %17, %16 : vector<64x32xf32>
    %19 = tpu.reciprocal %18 {approx = true} : vector<64x32xf32> -> vector<64x32xf32>
    %20 = arith.mulf %18, %19 : vector<64x32xf32>
    %cst_15 = arith.constant 2.000000e+00 : f32
    %21 = vector.broadcast %cst_15 : f32 to vector<64x32xf32>
    %22 = arith.subf %21, %20 : vector<64x32xf32>
    %23 = arith.mulf %19, %22 : vector<64x32xf32>
    %cst_16 = arith.constant 1.06140542 : f32
    %24 = vector.broadcast %cst_16 : f32 to vector<64x32xf32>
    %25 = arith.mulf %24, %23 : vector<64x32xf32>
    %cst_17 = arith.constant -1.45315206 : f32
    %26 = vector.broadcast %cst_17 : f32 to vector<64x32xf32>
    %27 = arith.addf %25, %26 : vector<64x32xf32>
    %28 = arith.mulf %27, %23 : vector<64x32xf32>
    %cst_18 = arith.constant 1.42141378 : f32
    %29 = vector.broadcast %cst_18 : f32 to vector<64x32xf32>
    %30 = arith.addf %28, %29 : vector<64x32xf32>
    %31 = arith.mulf %30, %23 : vector<64x32xf32>
    %cst_19 = arith.constant -0.284496725 : f32
    %32 = vector.broadcast %cst_19 : f32 to vector<64x32xf32>
    %33 = arith.addf %31, %32 : vector<64x32xf32>
    %34 = arith.mulf %33, %23 : vector<64x32xf32>
    %cst_20 = arith.constant 0.254829586 : f32
    %35 = vector.broadcast %cst_20 : f32 to vector<64x32xf32>
    %36 = arith.addf %34, %35 : vector<64x32xf32>
    %37 = arith.mulf %36, %23 : vector<64x32xf32>
    %cst_21 = arith.constant 0.000000e+00 : f32
    %38 = vector.broadcast %cst_21 : f32 to vector<64x32xf32>
    %39 = arith.subf %38, %14 : vector<64x32xf32>
    %40 = arith.mulf %39, %14 : vector<64x32xf32>
    %41 = math.exp %40 : vector<64x32xf32>
    %42 = arith.mulf %37, %41 : vector<64x32xf32>
    %cst_22 = arith.constant 1.000000e+00 : f32
    %43 = vector.broadcast %cst_22 : f32 to vector<64x32xf32>
    %44 = arith.subf %43, %42 : vector<64x32xf32>
    %cst_23 = arith.constant 0.000000e+00 : f32
    %45 = vector.broadcast %cst_23 : f32 to vector<64x32xf32>
    %46 = arith.cmpf olt, %13, %45 : vector<64x32xf32>
    %cst_24 = arith.constant 0.000000e+00 : f32
    %47 = vector.broadcast %cst_24 : f32 to vector<64x32xf32>
    %48 = arith.subf %47, %44 : vector<64x32xf32>
    %49 = arith.select %46, %48, %44 : vector<64x32xi1>, vector<64x32xf32>
    %cst_25 = arith.constant 1.000000e+00 : f32
    %50 = vector.broadcast %cst_25 : f32 to vector<64x32xf32>
    %51 = arith.addf %50, %49 : vector<64x32xf32>
    %52 = arith.mulf %11, %51 : vector<64x32xf32>
    %53 = vector.extract_strided_slice %52 {offsets = [0, 0], sizes = [32, 32], strides = [1, 1]} : vector<64x32xf32> to vector<32x32xf32>
    %54 = vector.broadcast %0 : f32 to vector<32x32xf32>
    %55 = arith.mulf %54, %53 : vector<32x32xf32>
    %56 = vector.extract_strided_slice %52 {offsets = [32, 0], sizes = [32, 32], strides = [1, 1]} : vector<64x32xf32> to vector<32x32xf32>
    %57 = vector.broadcast %1 : f32 to vector<32x32xf32>
    %58 = arith.mulf %57, %56 : vector<32x32xf32>
    %59 = arith.addf %55, %58 : vector<32x32xf32>
    %c0_26 = arith.constant 0 : index
    %c0_27 = arith.constant 0 : index
    %60 = vector.load %arg6[%c0_26, %c0_27] : memref<32x32xf32, #tpu.memory_space<vmem>>, vector<32x32xf32>
    %cst_28 = arith.constant dense<0.000000e+00> : vector<32x32xf32>
    %61 = tpu.matmul %59, %60, %cst_28 {dimension_numbers = #tpu.dot_dimension_numbers<[1], [0], [0], [1], [0, 0, 1, 1], [], []>} : vector<32x32xf32>, vector<32x32xf32>, vector<32x32xf32> -> vector<32x32xf32>
    %c0_29 = arith.constant 0 : index
    %c0_30 = arith.constant 0 : index
    %62 = vector.load %arg7[%c0_29, %c0_30] : memref<1x32xf32, #tpu.memory_space<vmem>>, vector<1x32xf32>
    %63 = vector.broadcast %62 : vector<1x32xf32> to vector<32x32xf32>
    %64 = arith.addf %61, %63 : vector<32x32xf32>
    %65 = vector.extract_strided_slice %64 {offsets = [0, 0], sizes = [8, 32], strides = [1, 1]} : vector<32x32xf32> to vector<8x32xf32>
    %66 = vector.extract_strided_slice %64 {offsets = [8, 0], sizes = [8, 32], strides = [1, 1]} : vector<32x32xf32> to vector<8x32xf32>
    %67 = vector.extract_strided_slice %64 {offsets = [16, 0], sizes = [8, 32], strides = [1, 1]} : vector<32x32xf32> to vector<8x32xf32>
    %68 = vector.extract_strided_slice %64 {offsets = [24, 0], sizes = [8, 32], strides = [1, 1]} : vector<32x32xf32> to vector<8x32xf32>
    %69 = tpu.concatenate %65, %66, %67, %68 in 1 : vector<8x32xf32>, vector<8x32xf32>, vector<8x32xf32>, vector<8x32xf32> -> vector<8x128xf32>
    %c0_31 = arith.constant 0 : index
    %c0_32 = arith.constant 0 : index
    %c0_33 = arith.constant 0 : index
    %70 = vector.load %arg8[%c0_31, %c0_32, %c0_33] : memref<1x8x128xf32, #tpu.memory_space<vmem>>, vector<1x8x128xf32>
    %71 = vector.shape_cast %70 : vector<1x8x128xf32> to vector<8x128xf32>
    %72 = vector.shape_cast %69 : vector<8x128xf32> to vector<1x8x128xf32>
    tpu.vector_store %arg8[%c0_31, %c0_32, %c0_33], %72 {strides = array<i32>} : memref<1x8x128xf32, #tpu.memory_space<vmem>>, vector<1x8x128xf32>,
    return
  }
  func.func @transform_0(%arg0: i32, %arg1: i32) -> (i32, i32) {
    %c0_i32 = arith.constant 0 : i32
    %c0_i32_0 = arith.constant 0 : i32
    %c0_i32_1 = arith.constant 0 : i32
    return %c0_i32, %c0_i32_0 : i32, i32
  }
  func.func @transform_1(%arg0: i32, %arg1: i32) -> (i32, i32, i32, i32, i32) {
    %c0_i32 = arith.constant 0 : i32
    %c0_i32_0 = arith.constant 0 : i32
    %c0_i32_1 = arith.constant 0 : i32
    %c0_i32_2 = arith.constant 0 : i32
    return %arg0, %c0_i32, %c0_i32_0, %arg1, %c0_i32_1 : i32, i32, i32, i32, i32
  }
  func.func @transform_2(%arg0: i32, %arg1: i32) -> (i32, i32) {
    %c0_i32 = arith.constant 0 : i32
    %c0_i32_0 = arith.constant 0 : i32
    %c0_i32_1 = arith.constant 0 : i32
    return %c0_i32, %c0_i32_0 : i32, i32
  }
  func.func @transform_3(%arg0: i32, %arg1: i32) -> (i32, i32) {
    %c0_i32 = arith.constant 0 : i32
    %c0_i32_0 = arith.constant 0 : i32
    %c0_i32_1 = arith.constant 0 : i32
    return %c0_i32, %c0_i32_0 : i32, i32
  }
  func.func @transform_4(%arg0: i32, %arg1: i32) -> (i32, i32) {
    %c0_i32 = arith.constant 0 : i32
    %c0_i32_0 = arith.constant 0 : i32
    %c0_i32_1 = arith.constant 0 : i32
    return %c0_i32, %c0_i32_0 : i32, i32
  }
  func.func @transform_5(%arg0: i32, %arg1: i32) -> (i32, i32) {
    %c0_i32 = arith.constant 0 : i32
    %c0_i32_0 = arith.constant 0 : i32
    %c0_i32_1 = arith.constant 0 : i32
    return %c0_i32, %c0_i32_0 : i32, i32
  }
  func.func @transform_6(%arg0: i32, %arg1: i32) -> (i32, i32, i32) {
    %c0_i32 = arith.constant 0 : i32
    %c0_i32_0 = arith.constant 0 : i32
    return %arg0, %arg1, %c0_i32 : i32, i32, i32
  }
}

</mosaic_0001>

<llo_original>
// kernel: mutations_to_latent_space.1
$region0: #{mutations_to_latent_space.1}
  #allocation0 [shape = 'u32[]', space=smem, size = 0x4, offset = 0x4, fixed_abs, tag = 'smem constant byte address 0x4 - core index']
  #allocation1 [shape = 'u32[144,128]{1,0:T(1,128)}', space=vmem, size = 0x12000, scoped, tag = 'internal scratch']
  %s0 = inlined_call_operand.vmem [shape: f32[1,2], index: 0, kind: input, shape index: {}]
  %s1 = inlined_call_operand.hbm [shape: f32[2,2,4,8,16], index: 1, kind: input, shape index: {}]
  %s2 = inlined_call_operand.hbm [shape: f32[16,32], index: 2, kind: input, shape index: {}]
  %s3 = inlined_call_operand.hbm [shape: f32[1,32], index: 3, kind: input, shape index: {}]
  %s4 = inlined_call_operand.hbm [shape: f32[32,32], index: 4, kind: input, shape index: {}]
  %s5 = inlined_call_operand.vmem [shape: f32[1,32], index: 5, kind: input, shape index: {}]
  %s6 = inlined_call_operand.hbm [shape: f32[2,8,128], index: 6, kind: output, shape index: {}]
  %s7 = sld [smem:[#allocation0]]
  $region77: #{mutations_to_latent_space.1} parent=0
    _
  %s9 = ssub.s32 1, %s7
  %s10 = scalar_select 0, %s9, %s7
  $region1: #{mutations_to_latent_space.1} parent=0
    #allocation2 [shape = 'u8[512]{0}', space=smem, size = 0x200, scoped, tag = 'input window, operand 0, single buffered']
    #allocation3 [shape = 's32[2]{0}', space=sflag, size = 0x8, scoped, tag = 'scoped memory for mutations_to_latent_space.1']
    #allocation4 [shape = 's32[2]{0}', space=sflag, size = 0x8, scoped, tag = 'scoped memory for mutations_to_latent_space.1']
    #allocation5 [shape = 's32[2]{0}', space=sflag, size = 0x8, scoped, tag = 'scoped memory for mutations_to_latent_space.1']
    #allocation6 [shape = 'u8[65536]{0}', space=vmem, size = 0x10000, scoped, tag = 'input window, operand 1']
    #allocation7 [shape = 'u8[8192]{0}', space=vmem, size = 0x2000, scoped, tag = 'input window, operand 2, single buffered']
    #allocation8 [shape = 's32[1]{0}', space=sflag, size = 0x4, scoped, tag = 'scoped memory for mutations_to_latent_space.1']
    #allocation9 [shape = 'u8[512]{0}', space=vmem, size = 0x400, scoped, tag = 'input window, operand 3, single buffered']
    #allocation10 [shape = 'u8[16384]{0}', space=vmem, size = 0x4000, scoped, tag = 'input window, operand 4, single buffered']
    #allocation11 [shape = 's32[1]{0}', space=sflag, size = 0x4, scoped, tag = 'scoped memory for mutations_to_latent_space.1']
    #allocation12 [shape = 'u8[8192]{0}', space=vmem, size = 0x2000, scoped, tag = 'output window, operand 0']
    %11 = vsyncpa [#allocation5], 0
    %12 = vsyncpa [#allocation3], 0
    %s13 = scalar_lea.sflag [#allocation3], 1
    %14 = vsyncpa %s13, 0
    %15 = vsyncpa [#allocation8], 0
    %16 = vsyncpa [#allocation11], 0
    %17 = vsyncpa [#allocation4], 0
    %s18 = scalar_lea.sflag [#allocation4], 1
    %19 = vsyncpa %s18, 0
    loop: start=0, step=1, limit=4
    $region2: #{mutations_to_latent_space.1} parent=1 // loop_pre_header
      _
    $region3: #{mutations_to_latent_space.1} parent=1 // loop_header
      %s21 = sphi 0, %s25
      %p22 = scmp.ge.s32.totalorder %s21, 4
      %s28 = sphi 0, %s40
      %s29 = sphi 0, %s36
      %s30 = sphi 0, %s28
      %s31 = sphi 0, %s29
      %s32 = sphi 0, %s30
      %s33 = sphi 0, %s31
      %s41 = sphi 0, %s41
      %s43 = sphi 0, %s41
      %s44 = sphi 0, %s43
      %s58 = sphi 0, %s44
      %s66 = sphi 0, %s68
      %s69 = sphi 0, %s66
      %s70 = sphi 0, %s69
      %s86 = sphi 0, %s70
      %s90 = sphi 0, %s90
      %s92 = sphi 0, %s90
      %s93 = sphi 0, %s92
      %s107 = sphi 0, %s93
      %s111 = sphi 0, %s111
      %s113 = sphi 0, %s111
      %s114 = sphi 0, %s113
      %s128 = sphi 0, %s114
      %s132 = sphi 0, %s132
      %s134 = sphi 0, %s132
      %s135 = sphi 0, %s134
      %s149 = sphi 0, %s135
      %s153 = sphi 0, %s153
      %s155 = sphi 0, %s153
      %s156 = sphi 0, %s155
      %s170 = sphi 0, %s156
      %s178 = sphi 0, %s180
      %s181 = sphi 0, %s178
      %s182 = sphi 0, %s181
      %s198 = sphi 0, %s182
    $region4: #{mutations_to_latent_space.1} parent=1 // loop_header_branch
      %24 = sbr.rel (%p22) target = $region8
    $region5: #{mutations_to_latent_space.1} parent=1 // loop_body
      %s26 = ssub.s32 %s21, 1
      %s27 = ssub.s32 %s21, 2
      %s34 = sadd.s32 1, %s29
      %p35 = scmp.ge.s32.totalorder %s34, 1
      %s36 = scalar_select %p35, 0, %s34
      %s37 = sadd.s32 1, %s28
      %s38 = scalar_select %p35, %s37, %s28
      %p39 = scmp.ge.s32.totalorder %s38, 2
      %s40 = scalar_select %p39, 0, %s38
      %s42 = sadd.s32 %s41, 1
      %p45 = scmp.eq.s32.totalorder %s21, 1
      %p46 = scmp.ne.s32.totalorder %s41, %s43
      %p47 = scmp.eq.s32.totalorder %s21, 0
      %p48 = por %p46, %p47
      %p49 = scmp.ne.s32.totalorder %s41, %s43
      %p50 = scmp.eq.s32.totalorder %s26, 1
      %p51 = por %p49, %p50
      %p52 = scmp.ne.s32.totalorder %s43, %s44
      %p53 = scmp.eq.s32.totalorder %s26, 0
      %p54 = por %p52, %p53
      %p55 = scmp.ne.s32.totalorder %s43, %s44
      %p56 = scmp.eq.s32.totalorder %s27, 1
      %p57 = por %p55, %p56
      %p59 = scmp.ne.s32.totalorder %s44, %s58
      %p60 = scmp.eq.s32.totalorder %s27, 0
      %p61 = por %p59, %p60
      %s62 = ssub.s32 %s28, %s40
      %s63 = ssub.s32 %s29, %s36
      %s64 = sor.u32 %s62, %s63
      %p65 = scmp.eq.s32.totalorder %s64, 0
      %s67 = sadd.s32 %s66, 1
      %s68 = scalar_select %p65, %s66, %s67
      %p71 = pneg %p65
      %p72 = scmp.eq.s32.totalorder %s21, 1
      %p73 = por %p71, %p72
      %p74 = scmp.ne.s32.totalorder %s66, %s69
      %p75 = scmp.eq.s32.totalorder %s21, 0
      %p76 = por %p74, %p75
      %p77 = scmp.ne.s32.totalorder %s66, %s69
      %p78 = scmp.eq.s32.totalorder %s26, 1
      %p79 = por %p77, %p78
      %p80 = scmp.ne.s32.totalorder %s69, %s70
      %p81 = scmp.eq.s32.totalorder %s26, 0
      %p82 = por %p80, %p81
      %p83 = scmp.ne.s32.totalorder %s69, %s70
      %p84 = scmp.eq.s32.totalorder %s27, 1
      %p85 = por %p83, %p84
      %p87 = scmp.ne.s32.totalorder %s70, %s86
      %p88 = scmp.eq.s32.totalorder %s27, 0
      %p89 = por %p87, %p88
      %s91 = sadd.s32 %s90, 1
      %p94 = scmp.eq.s32.totalorder %s21, 1
      %p95 = scmp.ne.s32.totalorder %s90, %s92
      %p96 = scmp.eq.s32.totalorder %s21, 0
      %p97 = por %p95, %p96
      %p98 = scmp.ne.s32.totalorder %s90, %s92
      %p99 = scmp.eq.s32.totalorder %s26, 1
      %p100 = por %p98, %p99
      %p101 = scmp.ne.s32.totalorder %s92, %s93
      %p102 = scmp.eq.s32.totalorder %s26, 0
      %p103 = por %p101, %p102
      %p104 = scmp.ne.s32.totalorder %s92, %s93
      %p105 = scmp.eq.s32.totalorder %s27, 1
      %p106 = por %p104, %p105
      %p108 = scmp.ne.s32.totalorder %s93, %s107
      %p109 = scmp.eq.s32.totalorder %s27, 0
      %p110 = por %p108, %p109
      %s112 = sadd.s32 %s111, 1
      %p115 = scmp.eq.s32.totalorder %s21, 1
      %p116 = scmp.ne.s32.totalorder %s111, %s113
      %p117 = scmp.eq.s32.totalorder %s21, 0
      %p118 = por %p116, %p117
      %p119 = scmp.ne.s32.totalorder %s111, %s113
      %p120 = scmp.eq.s32.totalorder %s26, 1
      %p121 = por %p119, %p120
      %p122 = scmp.ne.s32.totalorder %s113, %s114
      %p123 = scmp.eq.s32.totalorder %s26, 0
      %p124 = por %p122, %p123
      %p125 = scmp.ne.s32.totalorder %s113, %s114
      %p126 = scmp.eq.s32.totalorder %s27, 1
      %p127 = por %p125, %p126
      %p129 = scmp.ne.s32.totalorder %s114, %s128
      %p130 = scmp.eq.s32.totalorder %s27, 0
      %p131 = por %p129, %p130
      %s133 = sadd.s32 %s132, 1
      %p136 = scmp.eq.s32.totalorder %s21, 1
      %p137 = scmp.ne.s32.totalorder %s132, %s134
      %p138 = scmp.eq.s32.totalorder %s21, 0
      %p139 = por %p137, %p138
      %p140 = scmp.ne.s32.totalorder %s132, %s134
      %p141 = scmp.eq.s32.totalorder %s26, 1
      %p142 = por %p140, %p141
      %p143 = scmp.ne.s32.totalorder %s134, %s135
      %p144 = scmp.eq.s32.totalorder %s26, 0
      %p145 = por %p143, %p144
      %p146 = scmp.ne.s32.totalorder %s134, %s135
      %p147 = scmp.eq.s32.totalorder %s27, 1
      %p148 = por %p146, %p147
      %p150 = scmp.ne.s32.totalorder %s135, %s149
      %p151 = scmp.eq.s32.totalorder %s27, 0
      %p152 = por %p150, %p151
      %s154 = sadd.s32 %s153, 1
      %p157 = scmp.eq.s32.totalorder %s21, 1
      %p158 = scmp.ne.s32.totalorder %s153, %s155
      %p159 = scmp.eq.s32.totalorder %s21, 0
      %p160 = por %p158, %p159
      %p161 = scmp.ne.s32.totalorder %s153, %s155
      %p162 = scmp.eq.s32.totalorder %s26, 1
      %p163 = por %p161, %p162
      %p164 = scmp.ne.s32.totalorder %s155, %s156
      %p165 = scmp.eq.s32.totalorder %s26, 0
      %p166 = por %p164, %p165
      %p167 = scmp.ne.s32.totalorder %s155, %s156
      %p168 = scmp.eq.s32.totalorder %s27, 1
      %p169 = por %p167, %p168
      %p171 = scmp.ne.s32.totalorder %s156, %s170
      %p172 = scmp.eq.s32.totalorder %s27, 0
      %p173 = por %p171, %p172
      %s174 = ssub.s32 %s28, %s40
      %s175 = ssub.s32 %s29, %s36
      %s176 = sor.u32 %s174, %s175
      %p177 = scmp.eq.s32.totalorder %s176, 0
      %s179 = sadd.s32 %s178, 1
      %s180 = scalar_select %p177, %s178, %s179
      %p183 = pneg %p177
      %p184 = scmp.eq.s32.totalorder %s21, 1
      %p185 = por %p183, %p184
      %p186 = scmp.ne.s32.totalorder %s178, %s181
      %p187 = scmp.eq.s32.totalorder %s21, 0
      %p188 = por %p186, %p187
      %p189 = scmp.ne.s32.totalorder %s178, %s181
      %p190 = scmp.eq.s32.totalorder %s26, 1
      %p191 = por %p189, %p190
      %p192 = scmp.ne.s32.totalorder %s181, %s182
      %p193 = scmp.eq.s32.totalorder %s26, 0
      %p194 = por %p192, %p193
      %p195 = scmp.ne.s32.totalorder %s181, %s182
      %p196 = scmp.eq.s32.totalorder %s27, 1
      %p197 = por %p195, %p196
      %p199 = scmp.ne.s32.totalorder %s182, %s198
      %p200 = scmp.eq.s32.totalorder %s27, 0
      %p201 = por %p199, %p200
      %p202 = scmp.le.s32.totalorder 1, %s21
      %p203 = scmp.lt.s32.totalorder %s21, 3
      %p204 = pnand %p202, %p203
      %p205 = pneg %p204
      // Predicated region
      $region9: #{mutations_to_latent_space.1} parent=5 // pred_check
        _
      $region10: #{mutations_to_latent_space.1} parent=5 // pred_check_branch
        %207 = sbr.rel (%p204) target = $region12
      $region11: #{mutations_to_latent_space.1} parent=5 // pred_region
        %s208 = ssub.s32 %s21, 1
        // Predicated region
        $region13: #{mutations_to_latent_space.1} parent=11 // pred_check
          %p209 = pneg %p54
        $region14: #{mutations_to_latent_space.1} parent=11 // pred_check_branch
          %211 = sbr.rel (%p209) target = $region16
        $region15: #{mutations_to_latent_space.1} parent=11 // pred_region
          %s213 = ssub.s32 16, 16
          %214 = vsyncadd [#allocation5], %s213
          %s216 = sshll.u32 %s0, 4
          %s217 = int_to_ptr.vmem [resolvable:$true] %s216
          %219 = dma.vmem_to_smem %s217, 16, [#allocation2], [#allocation5]
        $region16: #{mutations_to_latent_space.1} parent=11 // pred_fallthru
          _
        // Predicated region
        $region17: #{mutations_to_latent_space.1} parent=11 // pred_check
          %p220 = pneg %p103
        $region18: #{mutations_to_latent_space.1} parent=11 // pred_check_branch
          %222 = sbr.rel (%p220) target = $region20
        $region19: #{mutations_to_latent_space.1} parent=11 // pred_region
          %s224 = ssub.s32 256, 256
          %225 = vsyncadd [#allocation8], %s224
          %s226 = sshll.u32 [#allocation7], 4
          %s227 = int_to_ptr.vmem [resolvable:$true] %s226
          %232 = dma.hbm_to_vmem [thread:$0]  %s2, 256, %s227, [#allocation8], 128, 128, 8
        $region20: #{mutations_to_latent_space.1} parent=11 // pred_fallthru
          _
        // Predicated region
        $region21: #{mutations_to_latent_space.1} parent=11 // pred_check
          %p233 = pneg %p124
        $region22: #{mutations_to_latent_space.1} parent=11 // pred_check_branch
          %235 = sbr.rel (%p233) target = $region24
        $region23: #{mutations_to_latent_space.1} parent=11 // pred_region
          %s237 = ssub.s32 16, 16
          %238 = vsyncadd [#allocation8], %s237
          %s240 = sshll.u32 [#allocation9], 4
          %s241 = int_to_ptr.vmem [resolvable:$true] %s240
          %243 = dma.hbm_to_vmem [thread:$0]  %s3, 16, %s241, [#allocation8]
        $region24: #{mutations_to_latent_space.1} parent=11 // pred_fallthru
          _
        // Predicated region
        $region25: #{mutations_to_latent_space.1} parent=11 // pred_check
          %p244 = pneg %p145
        $region26: #{mutations_to_latent_space.1} parent=11 // pred_check_branch
          %246 = sbr.rel (%p244) target = $region28
        $region27: #{mutations_to_latent_space.1} parent=11 // pred_region
          %s248 = ssub.s32 512, 512
          %249 = vsyncadd [#allocation11], %s248
          %s250 = sshll.u32 [#allocation10], 4
          %s251 = int_to_ptr.vmem [resolvable:$true] %s250
          %256 = dma.hbm_to_vmem [thread:$0]  %s4, 512, %s251, [#allocation11], 128, 128, 8
        $region28: #{mutations_to_latent_space.1} parent=11 // pred_fallthru
          _
        // Predicated region
        $region29: #{mutations_to_latent_space.1} parent=11 // pred_check
          %p257 = pneg %p166
        $region30: #{mutations_to_latent_space.1} parent=11 // pred_check_branch
          %259 = sbr.rel (%p257) target = $region32
        $region31: #{mutations_to_latent_space.1} parent=11 // pred_region
          _
        $region32: #{mutations_to_latent_space.1} parent=11 // pred_fallthru
          _
      $region12: #{mutations_to_latent_space.1} parent=5 // pred_fallthru
        _
      %p260 = scmp.lt.s32.totalorder %s21, 2
      // Predicated region
      $region33: #{mutations_to_latent_space.1} parent=5 // pred_check
        %p261 = pneg %p260
      $region34: #{mutations_to_latent_space.1} parent=5 // pred_check_branch
        %263 = sbr.rel (%p261) target = $region36
      $region35: #{mutations_to_latent_space.1} parent=5 // pred_region
        // Predicated region
        $region37: #{mutations_to_latent_space.1} parent=35 // pred_check
          %p264 = pneg %p76
        $region38: #{mutations_to_latent_space.1} parent=35 // pred_check_branch
          %266 = sbr.rel (%p264) target = $region40
        $region39: #{mutations_to_latent_space.1} parent=35 // pred_region
          %s267 = sand.u32 %s66, 1
          %s268 = scalar_lea.sflag [#allocation3], %s267
          %s269 = sand.u32 %s66, 1
          %s270 = smul.addr %s269, 64
          %s271 = scalar_lea.vmem [#allocation6], %s270
          %s273 = ssub.s32 1024, 1024
          %274 = vsyncadd %s268, %s273
          %s275 = smul.addr %s28, 8
          %s276 = sadd.s32 %s29, %s275
          %s277 = smul.addr %s276, 128
          %s278 = scalar_lea.hbm %s1, %s277
          %s279 = sshll.u32 %s271, 4
          %s280 = int_to_ptr.vmem [resolvable:$true] %s279
          %285 = dma.hbm_to_vmem [thread:$0]  %s278, 1024, %s280, %s268, 128, 128, 8
        $region40: #{mutations_to_latent_space.1} parent=35 // pred_fallthru
          _
      $region36: #{mutations_to_latent_space.1} parent=5 // pred_fallthru
        _
      %p286 = scmp.le.s32.totalorder 1, %s21
      %p287 = scmp.lt.s32.totalorder %s21, 3
      %p288 = pnand %p286, %p287
      %p289 = pneg %p288
      // Predicated region
      $region41: #{mutations_to_latent_space.1} parent=5 // pred_check
        _
      $region42: #{mutations_to_latent_space.1} parent=5 // pred_check_branch
        %291 = sbr.rel (%p288) target = $region44
      $region43: #{mutations_to_latent_space.1} parent=5 // pred_region
        %s292 = ssub.s32 %s21, 1
        // Predicated region
        $region45: #{mutations_to_latent_space.1} parent=43 // pred_check
          %p293 = pneg %p54
        $region46: #{mutations_to_latent_space.1} parent=43 // pred_check_branch
          %295 = sbr.rel (%p293) target = $region48
        $region47: #{mutations_to_latent_space.1} parent=43 // pred_region
          %296 = dma.done [#allocation5], 16
        $region48: #{mutations_to_latent_space.1} parent=43 // pred_fallthru
          _
        %s297 = sand.u32 %s69, 1
        %s298 = scalar_lea.sflag [#allocation3], %s297
        %s299 = sand.u32 %s69, 1
        %s300 = smul.addr %s299, 64
        %s301 = scalar_lea.vmem [#allocation6], %s300
        // Predicated region
        $region49: #{mutations_to_latent_space.1} parent=43 // pred_check
          %p302 = pneg %p82
        $region50: #{mutations_to_latent_space.1} parent=43 // pred_check_branch
          %304 = sbr.rel (%p302) target = $region52
        $region51: #{mutations_to_latent_space.1} parent=43 // pred_region
          %305 = dma.done %s298, 1024
        $region52: #{mutations_to_latent_space.1} parent=43 // pred_fallthru
          _
        // Predicated region
        $region53: #{mutations_to_latent_space.1} parent=43 // pred_check
          %p306 = pneg %p103
        $region54: #{mutations_to_latent_space.1} parent=43 // pred_check_branch
          %308 = sbr.rel (%p306) target = $region56
        $region55: #{mutations_to_latent_space.1} parent=43 // pred_region
          %309 = dma.done [#allocation8], 256
        $region56: #{mutations_to_latent_space.1} parent=43 // pred_fallthru
          _
        // Predicated region
        $region57: #{mutations_to_latent_space.1} parent=43 // pred_check
          %p310 = pneg %p124
        $region58: #{mutations_to_latent_space.1} parent=43 // pred_check_branch
          %312 = sbr.rel (%p310) target = $region60
        $region59: #{mutations_to_latent_space.1} parent=43 // pred_region
          %313 = dma.done [#allocation8], 16
        $region60: #{mutations_to_latent_space.1} parent=43 // pred_fallthru
          _
        // Predicated region
        $region61: #{mutations_to_latent_space.1} parent=43 // pred_check
          %p314 = pneg %p145
        $region62: #{mutations_to_latent_space.1} parent=43 // pred_check_branch
          %316 = sbr.rel (%p314) target = $region64
        $region63: #{mutations_to_latent_space.1} parent=43 // pred_region
          %317 = dma.done [#allocation11], 512
        $region64: #{mutations_to_latent_space.1} parent=43 // pred_fallthru
          _
        %318 = sfence
        %p319 = pneg %p54
        %p320 = pneg %p51
        %s321 = sand.u32 %s69, 1
        %s322 = scalar_lea.sflag [#allocation3], %s321
        %s323 = sand.u32 %s69, 1
        %s324 = smul.addr %s323, 64
        %s325 = scalar_lea.vmem [#allocation6], %s324
        %p326 = pneg %p82
        %p327 = pneg %p79
        %p328 = pneg %p103
        %p329 = pneg %p100
        %p330 = pneg %p124
        %p331 = pneg %p121
        %p332 = pneg %p145
        %p333 = pneg %p142
        %p334 = pneg %p166
        %p335 = pneg %p163
        %p336 = pneg %p194
        %p337 = pneg %p191
        %s338 = sand.u32 %s181, 1
        %s339 = scalar_lea.sflag [#allocation4], %s338
        %s340 = sand.u32 %s181, 1
        %s341 = smul.addr %s340, 8
        %s342 = scalar_lea.vmem [#allocation12], %s341
        %s343 = sld [smem:[#allocation2]]
        %s344 = sld [smem:[#allocation2 + $0x1]]
        %v345 = vld [vmem:[%s301] sm:$0xff]
        %v346 = vld [vmem:[%s301 + $0x8] sm:$0xff]
        %v347 = vld [vmem:[%s301 + $0x10] sm:$0xff]
        %v348 = vld [vmem:[%s301 + $0x18] sm:$0xff]
        %v349 = vld [vmem:[%s301 + $0x20] sm:$0xff]
        %v350 = vld [vmem:[%s301 + $0x28] sm:$0xff]
        %v351 = vld [vmem:[%s301 + $0x30] sm:$0xff]
        %v352 = vld [vmem:[%s301 + $0x38] sm:$0xff]
        %v353 = vld [vmem:[#allocation7] sm:$0xff]
        %v354 = vld [vmem:[#allocation7 + $0x8] sm:$0xff]
        %v355 = vld [vmem:[#allocation9] sm:$0x1]
        %v357 = vlaneseq
        %v358 = vshrl.u32 %v357, 7
        %v359 = vsub.s32 0, %v358
        %v360 = vrot.slane %v355, %v359
        %vm362 = vcmask 130048
        %v364 = vsel %vm362, %v345, 0
        %v367 = vsel %vm362, %v346, 0
        %v370 = vsel %vm362, %v347, 0
        %v373 = vsel %vm362, %v348, 0
        %v376 = vsel %vm362, %v349, 0
        %v379 = vsel %vm362, %v350, 0
        %v382 = vsel %vm362, %v351, 0
        %v385 = vsel %vm362, %v352, 0
        %387 = vmatprep.subr.mxu0 0.0
        %388 = vmatpush1.msra.mxu0 0.0
        %389 = vmatprep.subr.mxu0 0.0
        %390 = vmatpush1.msra.mxu0 0.0
        %391 = vmatprep.subr.mxu0 0.0
        %392 = vmatpush1.msra.mxu0 0.0
        %393 = vmatprep.subr.mxu0 0.0
        %394 = vmatpush1.msra.mxu0 0.0
        %395 = vmatprep.subr.mxu0 0.0
        %396 = vmatpush1.msra.mxu0 0.0
        %397 = vmatprep.subr.mxu0 0.0
        %398 = vmatpush1.msra.mxu0 0.0
        %399 = vmatprep.subr.mxu0 0.0
        %400 = vmatpush1.msra.mxu0 0.0
        %401 = vmatprep.subr.mxu0 0.0
        %402 = vmatpush1.msra.mxu0 0.0
        %403 = vmatprep.subr.mxu0 0.0
        %404 = vmatpush1.msra.mxu0 0.0
        %405 = vmatprep.subr.mxu0 0.0
        %406 = vmatpush1.msra.mxu0 0.0
        %407 = vmatprep.subr.mxu0 0.0
        %408 = vmatpush1.msra.mxu0 0.0
        %409 = vmatprep.subr.mxu0 0.0
        %410 = vmatpush1.msra.mxu0 0.0
        %411 = vmatprep.subr.mxu0 0.0
        %412 = vmatpush1.msra.mxu0 0.0
        %413 = vmatprep.subr.mxu0 0.0
        %414 = vmatpush1.msra.mxu0 0.0
        %415 = vmatprep.subr.mxu0 0.0
        %416 = vmatpush1.msra.mxu0 %v354
        %417 = vmatprep.subr.mxu0 0.0
        %418 = vmatpush1.msra.mxu0 %v353
        %419 = vmatprep.subr.mxu0 0.0
        %420 = vmatpush2.msra.mxu0 0.0
        %421 = vmatprep.subr.mxu0 0.0
        %422 = vmatpush2.msra.mxu0 0.0
        %423 = vmatprep.subr.mxu0 0.0
        %424 = vmatpush2.msra.mxu0 0.0
        %425 = vmatprep.subr.mxu0 0.0
        %426 = vmatpush2.msra.mxu0 0.0
        %427 = vmatprep.subr.mxu0 0.0
        %428 = vmatpush2.msra.mxu0 0.0
        %429 = vmatprep.subr.mxu0 0.0
        %430 = vmatpush2.msra.mxu0 0.0
        %431 = vmatprep.subr.mxu0 0.0
        %432 = vmatpush2.msra.mxu0 0.0
        %433 = vmatprep.subr.mxu0 0.0
        %434 = vmatpush2.msra.mxu0 0.0
        %435 = vmatprep.subr.mxu0 0.0
        %436 = vmatpush2.msra.mxu0 0.0
        %437 = vmatprep.subr.mxu0 0.0
        %438 = vmatpush2.msra.mxu0 0.0
        %439 = vmatprep.subr.mxu0 0.0
        %440 = vmatpush2.msra.mxu0 0.0
        %441 = vmatprep.subr.mxu0 0.0
        %442 = vmatpush2.msra.mxu0 0.0
        %443 = vmatprep.subr.mxu0 0.0
        %444 = vmatpush2.msra.mxu0 0.0
        %445 = vmatprep.subr.mxu0 0.0
        %446 = vmatpush2.msra.mxu0 0.0
        %447 = vmatprep.subr.mxu0 0.0
        %448 = vmatpush2.msra.mxu0 0.0
        %449 = vmatprep.subr.mxu0 0.0
        %450 = vmatpush2.msra.mxu0 0.0
        %451 = vmatprep.mubr.f32.mxu0 0.0
        %452 = vmatmul.mubr.f32.gmra.mxu0 %v364
        %v453 = vpop.f32.mrf.mxu0
        %v454 = vadd.f32 %v360, %v453
        %v455 = vpop.f32.mrf.mxu0
        %456 = vmatprep.mubr.f32.mxu0 0.0
        %457 = vmatmul.mubr.f32.gmra.mxu0 %v367
        %v458 = vpop.f32.mrf.mxu0
        %v459 = vadd.f32 %v360, %v458
        %v460 = vpop.f32.mrf.mxu0
        %461 = vmatprep.mubr.f32.mxu0 0.0
        %462 = vmatmul.mubr.f32.gmra.mxu0 %v370
        %v463 = vpop.f32.mrf.mxu0
        %v464 = vadd.f32 %v360, %v463
        %v465 = vpop.f32.mrf.mxu0
        %466 = vmatprep.mubr.f32.mxu0 0.0
        %467 = vmatmul.mubr.f32.gmra.mxu0 %v373
        %v468 = vpop.f32.mrf.mxu0
        %v469 = vadd.f32 %v360, %v468
        %v470 = vpop.f32.mrf.mxu0
        %471 = vmatprep.mubr.f32.mxu0 0.0
        %472 = vmatmul.mubr.f32.gmra.mxu0 %v376
        %v473 = vpop.f32.mrf.mxu0
        %v474 = vadd.f32 %v360, %v473
        %v475 = vpop.f32.mrf.mxu0
        %476 = vmatprep.mubr.f32.mxu0 0.0
        %477 = vmatmul.mubr.f32.gmra.mxu0 %v379
        %v478 = vpop.f32.mrf.mxu0
        %v479 = vadd.f32 %v360, %v478
        %v480 = vpop.f32.mrf.mxu0
        %481 = vmatprep.mubr.f32.mxu0 0.0
        %482 = vmatmul.mubr.f32.gmra.mxu0 %v382
        %v483 = vpop.f32.mrf.mxu0
        %v484 = vadd.f32 %v360, %v483
        %v485 = vpop.f32.mrf.mxu0
        %486 = vmatprep.mubr.f32.mxu0 0.0
        %487 = vmatmul.mubr.f32.gmra.mxu0 %v385
        %v488 = vpop.f32.mrf.mxu0
        %v489 = vadd.f32 %v360, %v488
        %v490 = vpop.f32.mrf.mxu0
        %491 = vdwg.mxu0
        %v492 = vmul.f32 %v454, 0.5
        %v493 = vmul.f32 %v459, 0.5
        %v494 = vmul.f32 %v464, 0.5
        %v495 = vmul.f32 %v469, 0.5
        %v496 = vmul.f32 %v474, 0.5
        %v497 = vmul.f32 %v479, 0.5
        %v498 = vmul.f32 %v484, 0.5
        %v499 = vmul.f32 %v489, 0.5
        %v500 = vmul.f32 %v454, 0.70710677
        %v501 = vmul.f32 %v459, 0.70710677
        %v502 = vmul.f32 %v464, 0.70710677
        %v503 = vmul.f32 %v469, 0.70710677
        %v504 = vmul.f32 %v474, 0.70710677
        %v505 = vmul.f32 %v479, 0.70710677
        %v506 = vmul.f32 %v484, 0.70710677
        %v507 = vmul.f32 %v489, 0.70710677
        %v508 = vand.u32 2147483647, %v500
        %v509 = vand.u32 2147483647, %v501
        %v510 = vand.u32 2147483647, %v502
        %v511 = vand.u32 2147483647, %v503
        %v512 = vand.u32 2147483647, %v504
        %v513 = vand.u32 2147483647, %v505
        %v514 = vand.u32 2147483647, %v506
        %v515 = vand.u32 2147483647, %v507
        %v516 = vmul.f32 %v508, 0.3275911
        %v517 = vmul.f32 %v509, 0.3275911
        %v518 = vmul.f32 %v510, 0.3275911
        %v519 = vmul.f32 %v511, 0.3275911
        %v520 = vmul.f32 %v512, 0.3275911
        %v521 = vmul.f32 %v513, 0.3275911
        %v522 = vmul.f32 %v514, 0.3275911
        %v523 = vmul.f32 %v515, 0.3275911
        %v524 = vadd.f32 %v516, 1.0
        %v525 = vadd.f32 %v517, 1.0
        %v526 = vadd.f32 %v518, 1.0
        %v527 = vadd.f32 %v519, 1.0
        %v528 = vadd.f32 %v520, 1.0
        %v529 = vadd.f32 %v521, 1.0
        %v530 = vadd.f32 %v522, 1.0
        %v531 = vadd.f32 %v523, 1.0
        %v532 = vrcp.pop %v524
        %v533 = vrcp.pop %v525
        %v534 = vrcp.pop %v526
        %v535 = vrcp.pop %v527
        %v536 = vrcp.pop %v528
        %v537 = vrcp.pop %v529
        %v538 = vrcp.pop %v530
        %v539 = vrcp.pop %v531
        %v540 = vmul.f32 %v524, %v532
        %v541 = vmul.f32 %v525, %v533
        %v542 = vmul.f32 %v526, %v534
        %v543 = vmul.f32 %v527, %v535
        %v544 = vmul.f32 %v528, %v536
        %v545 = vmul.f32 %v529, %v537
        %v546 = vmul.f32 %v530, %v538
        %v547 = vmul.f32 %v531, %v539
        %v548 = vsub.f32 2.0, %v540
        %v549 = vsub.f32 2.0, %v541
        %v550 = vsub.f32 2.0, %v542
        %v551 = vsub.f32 2.0, %v543
        %v552 = vsub.f32 2.0, %v544
        %v553 = vsub.f32 2.0, %v545
        %v554 = vsub.f32 2.0, %v546
        %v555 = vsub.f32 2.0, %v547
        %v556 = vmul.f32 %v532, %v548
        %v557 = vmul.f32 %v533, %v549
        %v558 = vmul.f32 %v534, %v550
        %v559 = vmul.f32 %v535, %v551
        %v560 = vmul.f32 %v536, %v552
        %v561 = vmul.f32 %v537, %v553
        %v562 = vmul.f32 %v538, %v554
        %v563 = vmul.f32 %v539, %v555
        %v564 = vmul.f32 %v556, 1.0614054
        %v565 = vmul.f32 %v557, 1.0614054
        %v566 = vmul.f32 %v558, 1.0614054
        %v567 = vmul.f32 %v559, 1.0614054
        %v568 = vmul.f32 %v560, 1.0614054
        %v569 = vmul.f32 %v561, 1.0614054
        %v570 = vmul.f32 %v562, 1.0614054
        %v571 = vmul.f32 %v563, 1.0614054
        %v572 = vadd.f32 %v564, -1.4531521
        %v573 = vadd.f32 %v565, -1.4531521
        %v574 = vadd.f32 %v566, -1.4531521
        %v575 = vadd.f32 %v567, -1.4531521
        %v576 = vadd.f32 %v568, -1.4531521
        %v577 = vadd.f32 %v569, -1.4531521
        %v578 = vadd.f32 %v570, -1.4531521
        %v579 = vadd.f32 %v571, -1.4531521
        %v580 = vmul.f32 %v572, %v556
        %v581 = vmul.f32 %v573, %v557
        %v582 = vmul.f32 %v574, %v558
        %v583 = vmul.f32 %v575, %v559
        %v584 = vmul.f32 %v576, %v560
        %v585 = vmul.f32 %v577, %v561
        %v586 = vmul.f32 %v578, %v562
        %v587 = vmul.f32 %v579, %v563
        %v588 = vadd.f32 %v580, 1.4214138
        %v589 = vadd.f32 %v581, 1.4214138
        %v590 = vadd.f32 %v582, 1.4214138
        %v591 = vadd.f32 %v583, 1.4214138
        %v592 = vadd.f32 %v584, 1.4214138
        %v593 = vadd.f32 %v585, 1.4214138
        %v594 = vadd.f32 %v586, 1.4214138
        %v595 = vadd.f32 %v587, 1.4214138
        %v596 = vmul.f32 %v588, %v556
        %v597 = vmul.f32 %v589, %v557
        %v598 = vmul.f32 %v590, %v558
        %v599 = vmul.f32 %v591, %v559
        %v600 = vmul.f32 %v592, %v560
        %v601 = vmul.f32 %v593, %v561
        %v602 = vmul.f32 %v594, %v562
        %v603 = vmul.f32 %v595, %v563
        %v604 = vadd.f32 %v596, -0.28449672
        %v605 = vadd.f32 %v597, -0.28449672
        %v606 = vadd.f32 %v598, -0.28449672
        %v607 = vadd.f32 %v599, -0.28449672
        %v608 = vadd.f32 %v600, -0.28449672
        %v609 = vadd.f32 %v601, -0.28449672
        %v610 = vadd.f32 %v602, -0.28449672
        %v611 = vadd.f32 %v603, -0.28449672
        %v612 = vmul.f32 %v604, %v556
        %v613 = vmul.f32 %v605, %v557
        %v614 = vmul.f32 %v606, %v558
        %v615 = vmul.f32 %v607, %v559
        %v616 = vmul.f32 %v608, %v560
        %v617 = vmul.f32 %v609, %v561
        %v618 = vmul.f32 %v610, %v562
        %v619 = vmul.f32 %v611, %v563
        %v620 = vadd.f32 %v612, 0.2548296
        %v621 = vadd.f32 %v613, 0.2548296
        %v622 = vadd.f32 %v614, 0.2548296
        %v623 = vadd.f32 %v615, 0.2548296
        %v624 = vadd.f32 %v616, 0.2548296
        %v625 = vadd.f32 %v617, 0.2548296
        %v626 = vadd.f32 %v618, 0.2548296
        %v627 = vadd.f32 %v619, 0.2548296
        %v628 = vmul.f32 %v620, %v556
        %v629 = vmul.f32 %v621, %v557
        %v630 = vmul.f32 %v622, %v558
        %v631 = vmul.f32 %v623, %v559
        %v632 = vmul.f32 %v624, %v560
        %v633 = vmul.f32 %v625, %v561
        %v634 = vmul.f32 %v626, %v562
        %v635 = vmul.f32 %v627, %v563
        %v636 = vsub.f32 0.0, %v508
        %v637 = vsub.f32 0.0, %v509
        %v638 = vsub.f32 0.0, %v510
        %v639 = vsub.f32 0.0, %v511
        %v640 = vsub.f32 0.0, %v512
        %v641 = vsub.f32 0.0, %v513
        %v642 = vsub.f32 0.0, %v514
        %v643 = vsub.f32 0.0, %v515
        %v644 = vmul.f32 %v636, %v508
        %v645 = vmul.f32 %v637, %v509
        %v646 = vmul.f32 %v638, %v510
        %v647 = vmul.f32 %v639, %v511
        %v648 = vmul.f32 %v640, %v512
        %v649 = vmul.f32 %v641, %v513
        %v650 = vmul.f32 %v642, %v514
        %v651 = vmul.f32 %v643, %v515
        %v652 = vmul.f32 %v644, 1.442695
        %v653 = vpow.pop %v652
        %v654 = vmul.f32 %v645, 1.442695
        %v655 = vpow.pop %v654
        %v656 = vmul.f32 %v646, 1.442695
        %v657 = vpow.pop %v656
        %v658 = vmul.f32 %v647, 1.442695
        %v659 = vpow.pop %v658
        %v660 = vmul.f32 %v648, 1.442695
        %v661 = vpow.pop %v660
        %v662 = vmul.f32 %v649, 1.442695
        %v663 = vpow.pop %v662
        %v664 = vmul.f32 %v650, 1.442695
        %v665 = vpow.pop %v664
        %v666 = vmul.f32 %v651, 1.442695
        %v667 = vpow.pop %v666
        %v668 = vmul.f32 %v628, %v653
        %v669 = vmul.f32 %v629, %v655
        %v670 = vmul.f32 %v630, %v657
        %v671 = vmul.f32 %v631, %v659
        %v672 = vmul.f32 %v632, %v661
        %v673 = vmul.f32 %v633, %v663
        %v674 = vmul.f32 %v634, %v665
        %v675 = vmul.f32 %v635, %v667
        %v676 = vsub.f32 1.0, %v668
        %v677 = vsub.f32 1.0, %v669
        %v678 = vsub.f32 1.0, %v670
        %v679 = vsub.f32 1.0, %v671
        %v680 = vsub.f32 1.0, %v672
        %v681 = vsub.f32 1.0, %v673
        %v682 = vsub.f32 1.0, %v674
        %v683 = vsub.f32 1.0, %v675
        %vm684 = vcmp.lt.f32.partialorder %v500, 0.0
        %vm685 = vcmp.lt.f32.partialorder %v501, 0.0
        %vm686 = vcmp.lt.f32.partialorder %v502, 0.0
        %vm687 = vcmp.lt.f32.partialorder %v503, 0.0
        %vm688 = vcmp.lt.f32.partialorder %v504, 0.0
        %vm689 = vcmp.lt.f32.partialorder %v505, 0.0
        %vm690 = vcmp.lt.f32.partialorder %v506, 0.0
        %vm691 = vcmp.lt.f32.partialorder %v507, 0.0
        %v692 = vsub.f32 0.0, %v676
        %v693 = vsub.f32 0.0, %v677
        %v694 = vsub.f32 0.0, %v678
        %v695 = vsub.f32 0.0, %v679
        %v696 = vsub.f32 0.0, %v680
        %v697 = vsub.f32 0.0, %v681
        %v698 = vsub.f32 0.0, %v682
        %v699 = vsub.f32 0.0, %v683
        %v700 = vsel %vm684, %v692, %v676
        %v701 = vsel %vm685, %v693, %v677
        %v702 = vsel %vm686, %v694, %v678
        %v703 = vsel %vm687, %v695, %v679
        %v704 = vsel %vm688, %v696, %v680
        %v705 = vsel %vm689, %v697, %v681
        %v706 = vsel %vm690, %v698, %v682
        %v707 = vsel %vm691, %v699, %v683
        %v708 = vadd.f32 %v700, 1.0
        %v709 = vadd.f32 %v701, 1.0
        %v710 = vadd.f32 %v702, 1.0
        %v711 = vadd.f32 %v703, 1.0
        %v712 = vadd.f32 %v704, 1.0
        %v713 = vadd.f32 %v705, 1.0
        %v714 = vadd.f32 %v706, 1.0
        %v715 = vadd.f32 %v707, 1.0
        %v716 = vmul.f32 %v492, %v708
        %v717 = vmul.f32 %v493, %v709
        %v718 = vmul.f32 %v494, %v710
        %v719 = vmul.f32 %v495, %v711
        %v720 = vmul.f32 %v496, %v712
        %v721 = vmul.f32 %v497, %v713
        %v722 = vmul.f32 %v498, %v714
        %v723 = vmul.f32 %v499, %v715
        %v724 = vstv %s343
        %v725 = vmul.f32 %v724, %v716
        %v726 = vmul.f32 %v724, %v717
        %v727 = vmul.f32 %v724, %v718
        %v728 = vmul.f32 %v724, %v719
        %v729 = vstv %s344
        %v730 = vmul.f32 %v729, %v720
        %v731 = vmul.f32 %v729, %v721
        %v732 = vmul.f32 %v729, %v722
        %v733 = vmul.f32 %v729, %v723
        %v734 = vadd.f32 %v725, %v730
        %v735 = vadd.f32 %v726, %v731
        %v736 = vadd.f32 %v727, %v732
        %v737 = vadd.f32 %v728, %v733
        %v738 = vld [vmem:[#allocation10] sm:$0xff]
        %v739 = vld [vmem:[#allocation10 + $0x8] sm:$0xff]
        %v740 = vld [vmem:[#allocation10 + $0x10] sm:$0xff]
        %v741 = vld [vmem:[#allocation10 + $0x18] sm:$0xff]
        %v742 = vld [vmem:[%s5] sm:$0x1]
        %v744 = vlaneseq
        %v745 = vshrl.u32 %v744, 7
        %v746 = vsub.s32 0, %v745
        %v747 = vrot.slane %v742, %v746
        %vm749 = vcmask 261120
        %v751 = vsel %vm749, %v734, 0
        %v754 = vsel %vm749, %v735, 0
        %v757 = vsel %vm749, %v736, 0
        %v760 = vsel %vm749, %v737, 0
        %762 = vmatprep.subr.mxu0 0.0
        %763 = vmatpush1.msra.mxu0 0.0
        %764 = vmatprep.subr.mxu0 0.0
        %765 = vmatpush1.msra.mxu0 0.0
        %766 = vmatprep.subr.mxu0 0.0
        %767 = vmatpush1.msra.mxu0 0.0
        %768 = vmatprep.subr.mxu0 0.0
        %769 = vmatpush1.msra.mxu0 0.0
        %770 = vmatprep.subr.mxu0 0.0
        %771 = vmatpush1.msra.mxu0 0.0
        %772 = vmatprep.subr.mxu0 0.0
        %773 = vmatpush1.msra.mxu0 0.0
        %774 = vmatprep.subr.mxu0 0.0
        %775 = vmatpush1.msra.mxu0 0.0
        %776 = vmatprep.subr.mxu0 0.0
        %777 = vmatpush1.msra.mxu0 0.0
        %778 = vmatprep.subr.mxu0 0.0
        %779 = vmatpush1.msra.mxu0 0.0
        %780 = vmatprep.subr.mxu0 0.0
        %781 = vmatpush1.msra.mxu0 0.0
        %782 = vmatprep.subr.mxu0 0.0
        %783 = vmatpush1.msra.mxu0 0.0
        %784 = vmatprep.subr.mxu0 0.0
        %785 = vmatpush1.msra.mxu0 0.0
        %786 = vmatprep.subr.mxu0 0.0
        %787 = vmatpush1.msra.mxu0 %v741
        %788 = vmatprep.subr.mxu0 0.0
        %789 = vmatpush1.msra.mxu0 %v740
        %790 = vmatprep.subr.mxu0 0.0
        %791 = vmatpush1.msra.mxu0 %v739
        %792 = vmatprep.subr.mxu0 0.0
        %793 = vmatpush1.msra.mxu0 %v738
        %794 = vmatprep.subr.mxu0 0.0
        %795 = vmatpush2.msra.mxu0 0.0
        %796 = vmatprep.subr.mxu0 0.0
        %797 = vmatpush2.msra.mxu0 0.0
        %798 = vmatprep.subr.mxu0 0.0
        %799 = vmatpush2.msra.mxu0 0.0
        %800 = vmatprep.subr.mxu0 0.0
        %801 = vmatpush2.msra.mxu0 0.0
        %802 = vmatprep.subr.mxu0 0.0
        %803 = vmatpush2.msra.mxu0 0.0
        %804 = vmatprep.subr.mxu0 0.0
        %805 = vmatpush2.msra.mxu0 0.0
        %806 = vmatprep.subr.mxu0 0.0
        %807 = vmatpush2.msra.mxu0 0.0
        %808 = vmatprep.subr.mxu0 0.0
        %809 = vmatpush2.msra.mxu0 0.0
        %810 = vmatprep.subr.mxu0 0.0
        %811 = vmatpush2.msra.mxu0 0.0
        %812 = vmatprep.subr.mxu0 0.0
        %813 = vmatpush2.msra.mxu0 0.0
        %814 = vmatprep.subr.mxu0 0.0
        %815 = vmatpush2.msra.mxu0 0.0
        %816 = vmatprep.subr.mxu0 0.0
        %817 = vmatpush2.msra.mxu0 0.0
        %818 = vmatprep.subr.mxu0 0.0
        %819 = vmatpush2.msra.mxu0 0.0
        %820 = vmatprep.subr.mxu0 0.0
        %821 = vmatpush2.msra.mxu0 0.0
        %822 = vmatprep.subr.mxu0 0.0
        %823 = vmatpush2.msra.mxu0 0.0
        %824 = vmatprep.subr.mxu0 0.0
        %825 = vmatpush2.msra.mxu0 0.0
        %826 = vmatprep.mubr.f32.mxu0 0.0
        %827 = vmatmul.mubr.f32.gmra.mxu0 %v751
        %v828 = vpop.f32.mrf.mxu0
        %v829 = vadd.f32 %v747, %v828
        %v830 = vpop.f32.mrf.mxu0
        %831 = vmatprep.mubr.f32.mxu0 0.0
        %832 = vmatmul.mubr.f32.gmra.mxu0 %v754
        %v833 = vpop.f32.mrf.mxu0
        %v834 = vadd.f32 %v747, %v833
        %v835 = vpop.f32.mrf.mxu0
        %836 = vmatprep.mubr.f32.mxu0 0.0
        %837 = vmatmul.mubr.f32.gmra.mxu0 %v757
        %v838 = vpop.f32.mrf.mxu0
        %v839 = vadd.f32 %v747, %v838
        %v840 = vpop.f32.mrf.mxu0
        %841 = vmatprep.mubr.f32.mxu0 0.0
        %842 = vmatmul.mubr.f32.gmra.mxu0 %v760
        %v843 = vpop.f32.mrf.mxu0
        %v844 = vadd.f32 %v747, %v843
        %v845 = vpop.f32.mrf.mxu0
        %846 = vdwg.mxu0
        %848 = vrot.lane.b32.xlu0 %v834, 32
        %v849 = vpop.permute.xlu0 %848
        %852 = vrot.lane.b32.xlu0 %v839, 64
        %v853 = vpop.permute.xlu0 %852
        %856 = vrot.lane.b32.xlu0 %v844, 96
        %v857 = vpop.permute.xlu0 %856
        %v859 = vsel %vm749, %v829, %v849
        %vm860 = vcmask 523264
        %v861 = vsel %vm860, %v859, %v853
        %vm862 = vcmask 785408
        %v863 = vsel %vm862, %v861, %v857
        %864 = vst [vmem:[%s342] sm:$0xff] %v863
        %s865 = sand.u32 %s181, 1
        %s866 = scalar_lea.sflag [#allocation4], %s865
        %s867 = sand.u32 %s181, 1
        %s868 = smul.addr %s867, 8
        %s869 = scalar_lea.vmem [#allocation12], %s868
        // Predicated region
        $region65: #{mutations_to_latent_space.1} parent=43 // pred_check
          %p870 = pneg %p191
        $region66: #{mutations_to_latent_space.1} parent=43 // pred_check_branch
          %872 = sbr.rel (%p870) target = $region68
        $region67: #{mutations_to_latent_space.1} parent=43 // pred_region
          %s874 = ssub.s32 128, 128
          %875 = vsyncadd %s866, %s874
          %s876 = sadd.s32 %s31, %s30
          %s877 = smul.addr %s876, 128
          %s878 = scalar_lea.hbm %s6, %s877
          %s880 = sshll.u32 %s869, 4
          %s881 = int_to_ptr.vmem [resolvable:$true] %s880
          %883 = dma.vmem_to_hbm [thread:$0]  %s881, 128, %s878, %s866
        $region68: #{mutations_to_latent_space.1} parent=43 // pred_fallthru
          _
      $region44: #{mutations_to_latent_space.1} parent=5 // pred_fallthru
        _
      %p884 = scmp.le.s32.totalorder 2, %s21
      // Predicated region
      $region69: #{mutations_to_latent_space.1} parent=5 // pred_check
        %p885 = pneg %p884
      $region70: #{mutations_to_latent_space.1} parent=5 // pred_check_branch
        %887 = sbr.rel (%p885) target = $region72
      $region71: #{mutations_to_latent_space.1} parent=5 // pred_region
        %s888 = ssub.s32 %s21, 2
        // Predicated region
        $region73: #{mutations_to_latent_space.1} parent=71 // pred_check
          %p889 = pneg %p197
        $region74: #{mutations_to_latent_space.1} parent=71 // pred_check_branch
          %891 = sbr.rel (%p889) target = $region76
        $region75: #{mutations_to_latent_space.1} parent=71 // pred_region
          %s892 = sand.u32 %s182, 1
          %s893 = scalar_lea.sflag [#allocation4], %s892
          %s894 = sand.u32 %s182, 1
          %s895 = smul.addr %s894, 8
          %s896 = scalar_lea.vmem [#allocation12], %s895
          %897 = dma.done %s893, 128
        $region76: #{mutations_to_latent_space.1} parent=71 // pred_fallthru
          _
      $region72: #{mutations_to_latent_space.1} parent=5 // pred_fallthru
        _
    $region6: #{mutations_to_latent_space.1} parent=1 // loop_footer
      %s25 = sadd.s32 1, %s21
    $region7: #{mutations_to_latent_space.1} parent=1 // loop_footer_branch
      %20 = sbr.rel target = $region3
    $region8: #{mutations_to_latent_space.1} parent=1 // loop_exit
      _
    %898 = vsyncpa [#allocation3], 1
    %s899 = scalar_lea.sflag [#allocation3], 1
    %900 = vsyncpa %s899, 1
    %901 = vsyncpa [#allocation8], 1
    %902 = vsyncpa [#allocation11], 1
    %903 = vsyncpa [#allocation4], 1
    %s904 = scalar_lea.sflag [#allocation4], 1
    %905 = vsyncpa %s904, 1
    %906 = vsyncpa [#allocation5], 1
    %s907 = scalar_lea.sflag [#allocation5], 1
    %908 = vsyncpa %s907, 1

</llo_original>
